<compile_context>
chip_gen: v6e
topology: v6e:2x2x1
jax: 0.10.0
libtpu: 0.0.40
codegen_flags: <defaults>
</compile_context>

<pallas_src>
import functools

import jax
import jax.numpy as jnp
from jax.experimental import pallas as pl
from jax.experimental.pallas import tpu as pltpu

EPS = 1e-5


def _largest_tile(dim, candidates=(128, 64, 32, 16, 8)):
    """Largest multiple-of-8 tile dividing `dim` (<=128), else the full dim."""
    for c in candidates:
        if dim % c == 0:
            return c
    return dim


@functools.partial(jax.jit, static_argnames=("stride",))
def unit_tcn_forward(x, w, gamma, beta, stride=1):
    """x: (N, C_in, T, V); w: (C_out, C_in, KT, 1) (PyTorch OIHW layout);
    gamma/beta: (C_out,).  Returns (N, C_out, T_out, V) in x.dtype."""
    N, C_in, T, V = x.shape
    C_out, _, KT, _ = w.shape
    pad = (KT - 1) // 2
    if stride != 1:
        # TODO(synk): stride>1 temporal conv needs a strided im2col gather; only
        # the module default stride=1 is implemented in the Pallas path.
        raise NotImplementedError("unit_tcn Pallas kernel supports stride=1")
    T_out = T + 2 * pad - KT + 1
    TV = T_out * V
    KC = KT * C_in

    # Tiny parameter plumbing: (C_out, C_in, KT) -> (C_out, KT*C_in), bf16 MXU operand.
    w2 = jnp.transpose(w[:, :, :, 0], (0, 2, 1)).reshape(C_out, KC).astype(jnp.bfloat16)

    # Free metadata reshape: merge the contiguous trailing (T, V) dims so the
    # kernel sees a lane-dense last axis (no HBM traffic).
    x_flat = x.reshape(N, C_in, T * V)

    # ---------- kernel 1: im2col + single bf16 MXU matmul + BN partials ----------
    def conv_stats_kernel(x_ref, w_ref, y_ref, s_ref, xc_ref):
        # x_ref : (1, C_in, T*V)  input dtype
        # w_ref : (C_out, KT*C_in) bf16
        # y_ref : (1, C_out, TV)  bf16 conv slab
        # s_ref : (1, C_out, 2)   f32 [sum, sumsq] partials
        # xc_ref: (KT*C_in, TV)   bf16 im2col scratch
        for k in range(KT):             # static unrolled taps
            d = k - pad
            t0 = max(0, -d)             # first valid output time step for this tap
            t1 = min(T_out, T - d)      # one past last valid output time step
            r0 = k * C_in
            if t0 > 0:                  # left pad strip (tiny; re-zeroed each step)
                xc_ref[r0:r0 + C_in, 0:t0 * V] = jnp.zeros(
                    (C_in, t0 * V), jnp.bfloat16)
            if t1 < T_out:              # right pad strip
                xc_ref[r0:r0 + C_in, t1 * V:T_out * V] = jnp.zeros(
                    (C_in, (T_out - t1) * V), jnp.bfloat16)
            if t1 > t0:                 # valid region: shifted copy of x, cast to bf16
                xc_ref[r0:r0 + C_in, t0 * V:t1 * V] = (
                    x_ref[0, :, (t0 + d) * V:(t1 + d) * V].astype(jnp.bfloat16))

        # One MXU matmul, contraction depth KT*C_in, f32 accumulate.
        acc = jnp.dot(w_ref[...], xc_ref[...], preferred_element_type=jnp.float32)
        y_ref[0] = acc.astype(y_ref.dtype)
        # Packed per-channel partial stats (computed from the f32 accumulator).
        s_ref[0, :, 0:1] = jnp.sum(acc, axis=-1, keepdims=True)
        s_ref[0, :, 1:2] = jnp.sum(acc * acc, axis=-1, keepdims=True)

    # VMEM budget for kernel 1 (double-buffered blocks + im2col scratch).
    b_x = C_in * T * V * x.dtype.itemsize
    b_w = C_out * KC * 2
    b_y = C_out * TV * 2
    b_s = C_out * 2 * 4
    b_xc = KC * TV * 2
    est1 = 2 * (b_x + b_w + b_y + b_s) + b_xc
    vmem1 = int(min(max(2 * est1, 32 * 1024 * 1024), 96 * 1024 * 1024))

    y_bf, stats = pl.pallas_call(
        conv_stats_kernel,
        out_shape=(
            jax.ShapeDtypeStruct((N, C_out, TV), jnp.bfloat16),
            jax.ShapeDtypeStruct((N, C_out, 2), jnp.float32),
        ),
        grid_spec=pltpu.PrefetchScalarGridSpec(
            num_scalar_prefetch=0,
            grid=(N,),
            in_specs=[
                pl.BlockSpec((1, C_in, T * V), lambda n: (n, 0, 0)),
                pl.BlockSpec((C_out, KC), lambda n: (0, 0)),
            ],
            out_specs=[
                pl.BlockSpec((1, C_out, TV), lambda n: (n, 0, 0)),
                pl.BlockSpec((1, C_out, 2), lambda n: (n, 0, 0)),
            ],
            scratch_shapes=[pltpu.VMEM((KC, TV), jnp.bfloat16)],
        ),
        compiler_params=pltpu.CompilerParams(
            dimension_semantics=("parallel",),
            vmem_limit_bytes=vmem1),
    )(x_flat, w2)

    # -------- tiny epilogue: fold partials into the per-channel BN affine --------
    count = N * TV
    tot = jnp.sum(stats, axis=0)                       # (C_out, 2)
    mean = tot[:, 0] / count
    var = jnp.maximum(tot[:, 1] / count - mean * mean, 0.0)   # biased, clamped
    scale = gamma.astype(jnp.float32) * jax.lax.rsqrt(var + EPS)
    shift = beta.astype(jnp.float32) - mean * scale
    scale2 = scale.reshape(C_out, 1)
    shift2 = shift.reshape(C_out, 1)

    # ---------------- kernel 2: per-channel BN affine ----------------
    co_t = _largest_tile(C_out)
    n_co = C_out // co_t

    def affine_kernel(y_ref, scale_ref, shift_ref, o_ref):
        o_ref[0] = (y_ref[0].astype(jnp.float32) * scale_ref[...]
                    + shift_ref[...]).astype(o_ref.dtype)

    b_blk = co_t * TV
    est2 = 2 * (b_blk * 2 + b_blk * x.dtype.itemsize + 2 * co_t * 4)
    vmem2 = int(min(max(2 * est2, 32 * 1024 * 1024), 96 * 1024 * 1024))

    # Alias the bf16 slab in place when the output dtype matches (saves a full
    # N*C_out*TV HBM allocation / peak footprint).
    alias = {0: 0} if x.dtype == jnp.bfloat16 else {}

    out = pl.pallas_call(
        affine_kernel,
        out_shape=jax.ShapeDtypeStruct((N, C_out, TV), x.dtype),
        grid_spec=pltpu.PrefetchScalarGridSpec(
            num_scalar_prefetch=0,
            grid=(N, n_co),
            in_specs=[
                pl.BlockSpec((1, co_t, TV), lambda n, c: (n, c, 0)),
                pl.BlockSpec((co_t, 1), lambda n, c: (c, 0)),
                pl.BlockSpec((co_t, 1), lambda n, c: (c, 0)),
            ],
            out_specs=pl.BlockSpec((1, co_t, TV), lambda n, c: (n, c, 0)),
        ),
        compiler_params=pltpu.CompilerParams(
            dimension_semantics=("parallel", "parallel"),
            vmem_limit_bytes=vmem2),
        input_output_aliases=alias,
    )(y_bf, scale2, shift2)

    # Free reshape: split the contiguous last dim back into (T_out, V).
    return out.reshape(N, C_out, T_out, V)


def _reference(x, w, gamma, beta, stride=1):
    """Pure-JAX f32 reference of the same forward pass (training-mode BN)."""
    pad = (w.shape[2] - 1) // 2
    y = jax.lax.conv_general_dilated(
        x.astype(jnp.float32), w.astype(jnp.float32),
        window_strides=(stride, 1), padding=[(pad, pad), (0, 0)],
        dimension_numbers=("NCHW", "OIHW", "NCHW"),
        precision=jax.lax.Precision.HIGHEST)
    mean = jnp.mean(y, axis=(0, 2, 3), keepdims=True)
    var = jnp.mean((y - mean) ** 2, axis=(0, 2, 3), keepdims=True)
    yhat = (y - mean) * jax.lax.rsqrt(var + EPS)
    out = yhat * gamma.reshape(1, -1, 1, 1) + beta.reshape(1, -1, 1, 1)
    return out.astype(x.dtype)


if __name__ == "__main__":
    # Small shapes consistent with the module: N=2, C_in=4, C_out=8, T=16,
    # V=16 joints, default kernel_size=9, stride=1.
    N, C_in, C_out, T, V = 2, 4, 8, 16, 16
    KT, stride = 9, 1

    key = jax.random.PRNGKey(0)
    kx, kw = jax.random.split(key)
    x = jax.random.normal(kx, (N, C_in, T, V), dtype=jnp.float32)
    # conv_init: kaiming_normal fan_out -> std = sqrt(2 / (C_out * KT * 1))
    w = jax.random.normal(kw, (C_out, C_in, KT, 1), jnp.float32) * (2.0 / (C_out * KT)) ** 0.5
    gamma = jnp.ones((C_out,), jnp.float32)   # bn_init(bn, 1): weight = 1
    beta = jnp.zeros((C_out,), jnp.float32)   #                 bias   = 0

    out = unit_tcn_forward(x, w, gamma, beta, stride=stride)
    out = jax.block_until_ready(out)

    ref = _reference(x, w, gamma, beta, stride)
    assert out.shape == (N, C_out, T, V)
    # Tolerance accounts for the bf16 MXU inputs + bf16 intermediate slab
    # (reference runs the conv in f32 Precision.HIGHEST); output is BN-normalized
    # so 5e-2 absolute is ~5% of one standard deviation.
    max_diff = float(jnp.max(jnp.abs(out - ref)))
    assert jnp.allclose(out, ref, atol=5e-2, rtol=5e-2), max_diff

    print("KERNEL_OK")
</pallas_src>

<mosaic_0001>
module attributes {stable_mosaic.version = 11 : i64} {
  func.func @conv_stats_kernel(%arg0: i32, %arg1: memref<1x4x256xf32, #tpu.memory_space<vmem>>, %arg2: memref<8x36xbf16, #tpu.memory_space<vmem>>, %arg3: memref<1x8x256xbf16, #tpu.memory_space<vmem>>, %arg4: memref<1x8x2xf32, #tpu.memory_space<vmem>>, %arg5: memref<36x256xbf16, #tpu.memory_space<vmem>>) attributes {dimension_semantics = [#tpu.dimension_semantics<parallel>], iteration_bounds = array<i64: 2>, scalar_prefetch = 0 : i64, scratch_operands = 1 : i64, tpu.core_type = #tpu.core_type<tc>, window_params = [{transform_indices = @transform_0, window_bounds = array<i64: 1, 4, 256>}, {pipeline_mode = #tpu.pipeline_mode<synchronous>, transform_indices = @transform_1, window_bounds = array<i64: 8, 36>}, {transform_indices = @transform_2, window_bounds = array<i64: 1, 8, 256>}, {transform_indices = @transform_3, window_bounds = array<i64: 1, 8, 2>}]} {
    %cst = arith.constant 0.000000e+00 : bf16
    %0 = vector.broadcast %cst : bf16 to vector<4x64xbf16>
    %c0 = arith.constant 0 : index
    %c0_0 = arith.constant 0 : index
    %1 = vector.load %arg5[%c0, %c0_0] : memref<36x256xbf16, #tpu.memory_space<vmem>>, vector<4x64xbf16>
    tpu.vector_store %arg5[%c0, %c0_0], %0 {strides = array<i32>} : memref<36x256xbf16, #tpu.memory_space<vmem>>, vector<4x64xbf16>,
    %c0_1 = arith.constant 0 : index
    %c0_2 = arith.constant 0 : index
    %c0_3 = arith.constant 0 : index
    %2 = vector.load %arg1[%c0_1, %c0_2, %c0_3] : memref<1x4x256xf32, #tpu.memory_space<vmem>>, vector<1x4x192xf32>
    %3 = vector.shape_cast %2 : vector<1x4x192xf32> to vector<4x192xf32>
    %4 = arith.truncf %3 : vector<4x192xf32> to vector<4x192xbf16>
    %c0_4 = arith.constant 0 : index
    %c64 = arith.constant 64 : index
    %5 = vector.load %arg5[%c0_4, %c64] : memref<36x256xbf16, #tpu.memory_space<vmem>>, vector<4x192xbf16>
    tpu.vector_store %arg5[%c0_4, %c64], %4 {strides = array<i32>} : memref<36x256xbf16, #tpu.memory_space<vmem>>, vector<4x192xbf16>,
    %cst_5 = arith.constant 0.000000e+00 : bf16
    %6 = vector.broadcast %cst_5 : bf16 to vector<4x48xbf16>
    %c4 = arith.constant 4 : index
    %c0_6 = arith.constant 0 : index
    %7 = vector.load %arg5[%c4, %c0_6] : memref<36x256xbf16, #tpu.memory_space<vmem>>, vector<4x48xbf16>
    tpu.vector_store %arg5[%c4, %c0_6], %6 {strides = array<i32>} : memref<36x256xbf16, #tpu.memory_space<vmem>>, vector<4x48xbf16>,
    %c0_7 = arith.constant 0 : index
    %c0_8 = arith.constant 0 : index
    %c0_9 = arith.constant 0 : index
    %8 = vector.load %arg1[%c0_7, %c0_8, %c0_9] : memref<1x4x256xf32, #tpu.memory_space<vmem>>, vector<1x4x208xf32>
    %9 = vector.shape_cast %8 : vector<1x4x208xf32> to vector<4x208xf32>
    %10 = arith.truncf %9 : vector<4x208xf32> to vector<4x208xbf16>
    %c4_10 = arith.constant 4 : index
    %c48 = arith.constant 48 : index
    %11 = vector.load %arg5[%c4_10, %c48] : memref<36x256xbf16, #tpu.memory_space<vmem>>, vector<4x208xbf16>
    tpu.vector_store %arg5[%c4_10, %c48], %10 {strides = array<i32>} : memref<36x256xbf16, #tpu.memory_space<vmem>>, vector<4x208xbf16>,
    %cst_11 = arith.constant 0.000000e+00 : bf16
    %12 = vector.broadcast %cst_11 : bf16 to vector<4x32xbf16>
    %c8 = arith.constant 8 : index
    %c0_12 = arith.constant 0 : index
    %13 = vector.load %arg5[%c8, %c0_12] : memref<36x256xbf16, #tpu.memory_space<vmem>>, vector<4x32xbf16>
    tpu.vector_store %arg5[%c8, %c0_12], %12 {strides = array<i32>} : memref<36x256xbf16, #tpu.memory_space<vmem>>, vector<4x32xbf16>,
    %c0_13 = arith.constant 0 : index
    %c0_14 = arith.constant 0 : index
    %c0_15 = arith.constant 0 : index
    %14 = vector.load %arg1[%c0_13, %c0_14, %c0_15] : memref<1x4x256xf32, #tpu.memory_space<vmem>>, vector<1x4x224xf32>
    %15 = vector.shape_cast %14 : vector<1x4x224xf32> to vector<4x224xf32>
    %16 = arith.truncf %15 : vector<4x224xf32> to vector<4x224xbf16>
    %c8_16 = arith.constant 8 : index
    %c32 = arith.constant 32 : index
    %17 = vector.load %arg5[%c8_16, %c32] : memref<36x256xbf16, #tpu.memory_space<vmem>>, vector<4x224xbf16>
    tpu.vector_store %arg5[%c8_16, %c32], %16 {strides = array<i32>} : memref<36x256xbf16, #tpu.memory_space<vmem>>, vector<4x224xbf16>,
    %cst_17 = arith.constant 0.000000e+00 : bf16
    %18 = vector.broadcast %cst_17 : bf16 to vector<4x16xbf16>
    %c12 = arith.constant 12 : index
    %c0_18 = arith.constant 0 : index
    %19 = vector.load %arg5[%c12, %c0_18] : memref<36x256xbf16, #tpu.memory_space<vmem>>, vector<4x16xbf16>
    tpu.vector_store %arg5[%c12, %c0_18], %18 {strides = array<i32>} : memref<36x256xbf16, #tpu.memory_space<vmem>>, vector<4x16xbf16>,
    %c0_19 = arith.constant 0 : index
    %c0_20 = arith.constant 0 : index
    %c0_21 = arith.constant 0 : index
    %20 = vector.load %arg1[%c0_19, %c0_20, %c0_21] : memref<1x4x256xf32, #tpu.memory_space<vmem>>, vector<1x4x240xf32>
    %21 = vector.shape_cast %20 : vector<1x4x240xf32> to vector<4x240xf32>
    %22 = arith.truncf %21 : vector<4x240xf32> to vector<4x240xbf16>
    %c12_22 = arith.constant 12 : index
    %c16 = arith.constant 16 : index
    %23 = vector.load %arg5[%c12_22, %c16] : memref<36x256xbf16, #tpu.memory_space<vmem>>, vector<4x240xbf16>
    tpu.vector_store %arg5[%c12_22, %c16], %22 {strides = array<i32>} : memref<36x256xbf16, #tpu.memory_space<vmem>>, vector<4x240xbf16>,
    %c0_23 = arith.constant 0 : index
    %c0_24 = arith.constant 0 : index
    %c0_25 = arith.constant 0 : index
    %24 = vector.load %arg1[%c0_23, %c0_24, %c0_25] : memref<1x4x256xf32, #tpu.memory_space<vmem>>, vector<1x4x256xf32>
    %25 = vector.shape_cast %24 : vector<1x4x256xf32> to vector<4x256xf32>
    %26 = arith.truncf %25 : vector<4x256xf32> to vector<4x256xbf16>
    %c16_26 = arith.constant 16 : index
    %c0_27 = arith.constant 0 : index
    %27 = vector.load %arg5[%c16_26, %c0_27] : memref<36x256xbf16, #tpu.memory_space<vmem>>, vector<4x256xbf16>
    tpu.vector_store %arg5[%c16_26, %c0_27], %26 {strides = array<i32>} : memref<36x256xbf16, #tpu.memory_space<vmem>>, vector<4x256xbf16>,
    %cst_28 = arith.constant 0.000000e+00 : bf16
    %28 = vector.broadcast %cst_28 : bf16 to vector<4x16xbf16>
    %c20 = arith.constant 20 : index
    %c240 = arith.constant 240 : index
    %29 = vector.load %arg5[%c20, %c240] : memref<36x256xbf16, #tpu.memory_space<vmem>>, vector<4x16xbf16>
    tpu.vector_store %arg5[%c20, %c240], %28 {strides = array<i32>} : memref<36x256xbf16, #tpu.memory_space<vmem>>, vector<4x16xbf16>,
    %c0_29 = arith.constant 0 : index
    %c0_30 = arith.constant 0 : index
    %c16_31 = arith.constant 16 : index
    %30 = vector.load %arg1[%c0_29, %c0_30, %c16_31] : memref<1x4x256xf32, #tpu.memory_space<vmem>>, vector<1x4x240xf32>
    %31 = vector.shape_cast %30 : vector<1x4x240xf32> to vector<4x240xf32>
    %32 = arith.truncf %31 : vector<4x240xf32> to vector<4x240xbf16>
    %c20_32 = arith.constant 20 : index
    %c0_33 = arith.constant 0 : index
    %33 = vector.load %arg5[%c20_32, %c0_33] : memref<36x256xbf16, #tpu.memory_space<vmem>>, vector<4x240xbf16>
    tpu.vector_store %arg5[%c20_32, %c0_33], %32 {strides = array<i32>} : memref<36x256xbf16, #tpu.memory_space<vmem>>, vector<4x240xbf16>,
    %cst_34 = arith.constant 0.000000e+00 : bf16
    %34 = vector.broadcast %cst_34 : bf16 to vector<4x32xbf16>
    %c24 = arith.constant 24 : index
    %c224 = arith.constant 224 : index
    %35 = vector.load %arg5[%c24, %c224] : memref<36x256xbf16, #tpu.memory_space<vmem>>, vector<4x32xbf16>
    tpu.vector_store %arg5[%c24, %c224], %34 {strides = array<i32>} : memref<36x256xbf16, #tpu.memory_space<vmem>>, vector<4x32xbf16>,
    %c0_35 = arith.constant 0 : index
    %c0_36 = arith.constant 0 : index
    %c32_37 = arith.constant 32 : index
    %36 = vector.load %arg1[%c0_35, %c0_36, %c32_37] : memref<1x4x256xf32, #tpu.memory_space<vmem>>, vector<1x4x224xf32>
    %37 = vector.shape_cast %36 : vector<1x4x224xf32> to vector<4x224xf32>
    %38 = arith.truncf %37 : vector<4x224xf32> to vector<4x224xbf16>
    %c24_38 = arith.constant 24 : index
    %c0_39 = arith.constant 0 : index
    %39 = vector.load %arg5[%c24_38, %c0_39] : memref<36x256xbf16, #tpu.memory_space<vmem>>, vector<4x224xbf16>
    tpu.vector_store %arg5[%c24_38, %c0_39], %38 {strides = array<i32>} : memref<36x256xbf16, #tpu.memory_space<vmem>>, vector<4x224xbf16>,
    %cst_40 = arith.constant 0.000000e+00 : bf16
    %40 = vector.broadcast %cst_40 : bf16 to vector<4x48xbf16>
    %c28 = arith.constant 28 : index
    %c208 = arith.constant 208 : index
    %41 = vector.load %arg5[%c28, %c208] : memref<36x256xbf16, #tpu.memory_space<vmem>>, vector<4x48xbf16>
    tpu.vector_store %arg5[%c28, %c208], %40 {strides = array<i32>} : memref<36x256xbf16, #tpu.memory_space<vmem>>, vector<4x48xbf16>,
    %c0_41 = arith.constant 0 : index
    %c0_42 = arith.constant 0 : index
    %c48_43 = arith.constant 48 : index
    %42 = vector.load %arg1[%c0_41, %c0_42, %c48_43] : memref<1x4x256xf32, #tpu.memory_space<vmem>>, vector<1x4x208xf32>
    %43 = vector.shape_cast %42 : vector<1x4x208xf32> to vector<4x208xf32>
    %44 = arith.truncf %43 : vector<4x208xf32> to vector<4x208xbf16>
    %c28_44 = arith.constant 28 : index
    %c0_45 = arith.constant 0 : index
    %45 = vector.load %arg5[%c28_44, %c0_45] : memref<36x256xbf16, #tpu.memory_space<vmem>>, vector<4x208xbf16>
    tpu.vector_store %arg5[%c28_44, %c0_45], %44 {strides = array<i32>} : memref<36x256xbf16, #tpu.memory_space<vmem>>, vector<4x208xbf16>,
    %cst_46 = arith.constant 0.000000e+00 : bf16
    %46 = vector.broadcast %cst_46 : bf16 to vector<4x64xbf16>
    %c32_47 = arith.constant 32 : index
    %c192 = arith.constant 192 : index
    %47 = vector.load %arg5[%c32_47, %c192] : memref<36x256xbf16, #tpu.memory_space<vmem>>, vector<4x64xbf16>
    tpu.vector_store %arg5[%c32_47, %c192], %46 {strides = array<i32>} : memref<36x256xbf16, #tpu.memory_space<vmem>>, vector<4x64xbf16>,
    %c0_48 = arith.constant 0 : index
    %c0_49 = arith.constant 0 : index
    %c64_50 = arith.constant 64 : index
    %48 = vector.load %arg1[%c0_48, %c0_49, %c64_50] : memref<1x4x256xf32, #tpu.memory_space<vmem>>, vector<1x4x192xf32>
    %49 = vector.shape_cast %48 : vector<1x4x192xf32> to vector<4x192xf32>
    %50 = arith.truncf %49 : vector<4x192xf32> to vector<4x192xbf16>
    %c32_51 = arith.constant 32 : index
    %c0_52 = arith.constant 0 : index
    %51 = vector.load %arg5[%c32_51, %c0_52] : memref<36x256xbf16, #tpu.memory_space<vmem>>, vector<4x192xbf16>
    tpu.vector_store %arg5[%c32_51, %c0_52], %50 {strides = array<i32>} : memref<36x256xbf16, #tpu.memory_space<vmem>>, vector<4x192xbf16>,
    %c0_53 = arith.constant 0 : index
    %c0_54 = arith.constant 0 : index
    %52 = vector.load %arg2[%c0_53, %c0_54] : memref<8x36xbf16, #tpu.memory_space<vmem>>, vector<8x36xbf16>
    %c0_55 = arith.constant 0 : index
    %c0_56 = arith.constant 0 : index
    %53 = vector.load %arg5[%c0_55, %c0_56] : memref<36x256xbf16, #tpu.memory_space<vmem>>, vector<36x256xbf16>
    %cst_57 = arith.constant dense<0.000000e+00> : vector<8x256xf32>
    %54 = tpu.matmul %52, %53, %cst_57 {dimension_numbers = #tpu.dot_dimension_numbers<[1], [0], [0], [1], [0, 0, 1, 1], [], []>} : vector<8x36xbf16>, vector<36x256xbf16>, vector<8x256xf32> -> vector<8x256xf32>
    %55 = arith.truncf %54 : vector<8x256xf32> to vector<8x256xbf16>
    %c0_58 = arith.constant 0 : index
    %c0_59 = arith.constant 0 : index
    %c0_60 = arith.constant 0 : index
    %56 = vector.load %arg3[%c0_58, %c0_59, %c0_60] : memref<1x8x256xbf16, #tpu.memory_space<vmem>>, vector<1x8x256xbf16>
    %57 = vector.shape_cast %56 : vector<1x8x256xbf16> to vector<8x256xbf16>
    %58 = vector.shape_cast %55 : vector<8x256xbf16> to vector<1x8x256xbf16>
    tpu.vector_store %arg3[%c0_58, %c0_59, %c0_60], %58 {strides = array<i32>} : memref<1x8x256xbf16, #tpu.memory_space<vmem>>, vector<1x8x256xbf16>,
    %cst_61 = arith.constant dense<0.000000e+00> : vector<8xf32>
    %59 = vector.multi_reduction <add>, %54, %cst_61 [1] : vector<8x256xf32> to vector<8xf32>
    %60 = vector.shape_cast %59 : vector<8xf32> to vector<8x1xf32>
    %c0_62 = arith.constant 0 : index
    %c0_63 = arith.constant 0 : index
    %c0_64 = arith.constant 0 : index
    %61 = vector.load %arg4[%c0_62, %c0_63, %c0_64] : memref<1x8x2xf32, #tpu.memory_space<vmem>>, vector<1x8x1xf32>
    %62 = vector.shape_cast %61 : vector<1x8x1xf32> to vector<8x1xf32>
    %63 = vector.shape_cast %60 : vector<8x1xf32> to vector<1x8x1xf32>
    tpu.vector_store %arg4[%c0_62, %c0_63, %c0_64], %63 {strides = array<i32>} : memref<1x8x2xf32, #tpu.memory_space<vmem>>, vector<1x8x1xf32>,
    %64 = arith.mulf %54, %54 : vector<8x256xf32>
    %cst_65 = arith.constant dense<0.000000e+00> : vector<8xf32>
    %65 = vector.multi_reduction <add>, %64, %cst_65 [1] : vector<8x256xf32> to vector<8xf32>
    %66 = vector.shape_cast %65 : vector<8xf32> to vector<8x1xf32>
    %c0_66 = arith.constant 0 : index
    %c0_67 = arith.constant 0 : index
    %c1 = arith.constant 1 : index
    %67 = vector.load %arg4[%c0_66, %c0_67, %c1] : memref<1x8x2xf32, #tpu.memory_space<vmem>>, vector<1x8x1xf32>
    %68 = vector.shape_cast %67 : vector<1x8x1xf32> to vector<8x1xf32>
    %69 = vector.shape_cast %66 : vector<8x1xf32> to vector<1x8x1xf32>
    tpu.vector_store %arg4[%c0_66, %c0_67, %c1], %69 {strides = array<i32>} : memref<1x8x2xf32, #tpu.memory_space<vmem>>, vector<1x8x1xf32>,
    return
  }
  func.func @transform_0(%arg0: i32) -> (i32, i32, i32) {
    %c0_i32 = arith.constant 0 : i32
    %c0_i32_0 = arith.constant 0 : i32
    %c0_i32_1 = arith.constant 0 : i32
    return %arg0, %c0_i32, %c0_i32_0 : i32, i32, i32
  }
  func.func @transform_1(%arg0: i32) -> (i32, i32) {
    %c0_i32 = arith.constant 0 : i32
    %c0_i32_0 = arith.constant 0 : i32
    %c0_i32_1 = arith.constant 0 : i32
    return %c0_i32, %c0_i32_0 : i32, i32
  }
  func.func @transform_2(%arg0: i32) -> (i32, i32, i32) {
    %c0_i32 = arith.constant 0 : i32
    %c0_i32_0 = arith.constant 0 : i32
    %c0_i32_1 = arith.constant 0 : i32
    return %arg0, %c0_i32, %c0_i32_0 : i32, i32, i32
  }
  func.func @transform_3(%arg0: i32) -> (i32, i32, i32) {
    %c0_i32 = arith.constant 0 : i32
    %c0_i32_0 = arith.constant 0 : i32
    %c0_i32_1 = arith.constant 0 : i32
    return %arg0, %c0_i32, %c0_i32_0 : i32, i32, i32
  }
}

module attributes {stable_mosaic.version = 11 : i64} {
  func.func @affine_kernel(%arg0: i32, %arg1: i32, %arg2: memref<1x8x256xbf16, #tpu.memory_space<vmem>>, %arg3: memref<8x1xf32, #tpu.memory_space<vmem>>, %arg4: memref<8x1xf32, #tpu.memory_space<vmem>>, %arg5: memref<1x8x256xf32, #tpu.memory_space<vmem>>) attributes {dimension_semantics = [#tpu.dimension_semantics<parallel>, #tpu.dimension_semantics<parallel>], iteration_bounds = array<i64: 2, 1>, scalar_prefetch = 0 : i64, scratch_operands = 0 : i64, tpu.core_type = #tpu.core_type<tc>, window_params = [{transform_indices = @transform_0, window_bounds = array<i64: 1, 8, 256>}, {transform_indices = @transform_1, window_bounds = array<i64: 8, 1>}, {transform_indices = @transform_2, window_bounds = array<i64: 8, 1>}, {transform_indices = @transform_3, window_bounds = array<i64: 1, 8, 256>}]} {
    %c0 = arith.constant 0 : index
    %c0_0 = arith.constant 0 : index
    %c0_1 = arith.constant 0 : index
    %0 = vector.load %arg2[%c0, %c0_0, %c0_1] : memref<1x8x256xbf16, #tpu.memory_space<vmem>>, vector<1x8x256xbf16>
    %1 = vector.shape_cast %0 : vector<1x8x256xbf16> to vector<8x256xbf16>
    %2 = arith.extf %1 : vector<8x256xbf16> to vector<8x256xf32>
    %c0_2 = arith.constant 0 : index
    %c0_3 = arith.constant 0 : index
    %3 = vector.load %arg3[%c0_2, %c0_3] : memref<8x1xf32, #tpu.memory_space<vmem>>, vector<8x1xf32>
    %4 = vector.broadcast %3 : vector<8x1xf32> to vector<8x256xf32>
    %5 = arith.mulf %2, %4 : vector<8x256xf32>
    %c0_4 = arith.constant 0 : index
    %c0_5 = arith.constant 0 : index
    %6 = vector.load %arg4[%c0_4, %c0_5] : memref<8x1xf32, #tpu.memory_space<vmem>>, vector<8x1xf32>
    %7 = vector.broadcast %6 : vector<8x1xf32> to vector<8x256xf32>
    %8 = arith.addf %5, %7 : vector<8x256xf32>
    %c0_6 = arith.constant 0 : index
    %c0_7 = arith.constant 0 : index
    %c0_8 = arith.constant 0 : index
    %9 = vector.load %arg5[%c0_6, %c0_7, %c0_8] : memref<1x8x256xf32, #tpu.memory_space<vmem>>, vector<1x8x256xf32>
    %10 = vector.shape_cast %9 : vector<1x8x256xf32> to vector<8x256xf32>
    %11 = vector.shape_cast %8 : vector<8x256xf32> to vector<1x8x256xf32>
    tpu.vector_store %arg5[%c0_6, %c0_7, %c0_8], %11 {strides = array<i32>} : memref<1x8x256xf32, #tpu.memory_space<vmem>>, vector<1x8x256xf32>,
    return
  }
  func.func @transform_0(%arg0: i32, %arg1: i32) -> (i32, i32, i32) {
    %c0_i32 = arith.constant 0 : i32
    %c0_i32_0 = arith.constant 0 : i32
    return %arg0, %arg1, %c0_i32 : i32, i32, i32
  }
  func.func @transform_1(%arg0: i32, %arg1: i32) -> (i32, i32) {
    %c0_i32 = arith.constant 0 : i32
    %c0_i32_0 = arith.constant 0 : i32
    return %arg1, %c0_i32 : i32, i32
  }
  func.func @transform_2(%arg0: i32, %arg1: i32) -> (i32, i32) {
    %c0_i32 = arith.constant 0 : i32
    %c0_i32_0 = arith.constant 0 : i32
    return %arg1, %c0_i32 : i32, i32
  }
  func.func @transform_3(%arg0: i32, %arg1: i32) -> (i32, i32, i32) {
    %c0_i32 = arith.constant 0 : i32
    %c0_i32_0 = arith.constant 0 : i32
    return %arg0, %arg1, %c0_i32 : i32, i32, i32
  }
}

</mosaic_0001>

<llo_original>
// kernel: unit_tcn_forward.3
$region0: #{unit_tcn_forward.3}
  #allocation0 [shape = 'u32[]', space=smem, size = 0x4, offset = 0x4, fixed_abs, tag = 'smem constant byte address 0x4 - core index']
  #allocation1 [shape = 'u32[144,128]{1,0:T(1,128)}', space=vmem, size = 0x12000, scoped, tag = 'internal scratch']
  %s0 = inlined_call_operand.vmem [shape: bf16[2,8,256], index: 0, kind: input, shape index: {}]
  %s1 = inlined_call_operand.vmem [shape: f32[8,1], index: 1, kind: input, shape index: {}]
  %s2 = inlined_call_operand.vmem [shape: f32[8,1], index: 2, kind: input, shape index: {}]
  %s3 = inlined_call_operand.vmem [shape: f32[2,8,256], index: 3, kind: output, shape index: {}]
  %s4 = sld [smem:[#allocation0]]
  $region45: #{unit_tcn_forward.3} parent=0
    _
  %s6 = ssub.s32 1, %s4
  %s7 = scalar_select 0, %s6, %s4
  loop: start=0, step=1, limit=4
  $region2: #{unit_tcn_forward.3} parent=0 // loop_pre_header
    _
  $region3: #{unit_tcn_forward.3} parent=0 // loop_header
    %s9 = sphi 0, %s13
    %p10 = scmp.ge.s32.totalorder %s9, 4
    %s16 = sphi 0, %s28
    %s17 = sphi 0, %s24
    %s18 = sphi 0, %s16
    %s19 = sphi 0, %s17
    %s20 = sphi 0, %s18
    %s21 = sphi 0, %s19
    %s33 = sphi 0, %s35
    %s36 = sphi 0, %s33
    %s37 = sphi 0, %s36
    %s53 = sphi 0, %s37
    %s59 = sphi 0, %s61
    %s62 = sphi 0, %s59
    %s63 = sphi 0, %s62
    %s79 = sphi 0, %s63
    %s85 = sphi 0, %s87
    %s88 = sphi 0, %s85
    %s89 = sphi 0, %s88
    %s105 = sphi 0, %s89
    %s113 = sphi 0, %s115
    %s116 = sphi 0, %s113
    %s117 = sphi 0, %s116
    %s133 = sphi 0, %s117
  $region4: #{unit_tcn_forward.3} parent=0 // loop_header_branch
    %12 = sbr.rel (%p10) target = $region8
  $region5: #{unit_tcn_forward.3} parent=0 // loop_body
    %s14 = ssub.s32 %s9, 1
    %s15 = ssub.s32 %s9, 2
    %s22 = sadd.s32 1, %s17
    %p23 = scmp.ge.s32.totalorder %s22, 1
    %s24 = scalar_select %p23, 0, %s22
    %s25 = sadd.s32 1, %s16
    %s26 = scalar_select %p23, %s25, %s16
    %p27 = scmp.ge.s32.totalorder %s26, 2
    %s28 = scalar_select %p27, 0, %s26
    %s29 = ssub.s32 %s16, %s28
    %s30 = ssub.s32 %s17, %s24
    %s31 = sor.u32 %s29, %s30
    %p32 = scmp.eq.s32.totalorder %s31, 0
    %s34 = sadd.s32 %s33, 1
    %s35 = scalar_select %p32, %s33, %s34
    %p38 = pneg %p32
    %p39 = scmp.eq.s32.totalorder %s9, 1
    %p40 = por %p38, %p39
    %p41 = scmp.ne.s32.totalorder %s33, %s36
    %p42 = scmp.eq.s32.totalorder %s9, 0
    %p43 = por %p41, %p42
    %p44 = scmp.ne.s32.totalorder %s33, %s36
    %p45 = scmp.eq.s32.totalorder %s14, 1
    %p46 = por %p44, %p45
    %p47 = scmp.ne.s32.totalorder %s36, %s37
    %p48 = scmp.eq.s32.totalorder %s14, 0
    %p49 = por %p47, %p48
    %p50 = scmp.ne.s32.totalorder %s36, %s37
    %p51 = scmp.eq.s32.totalorder %s15, 1
    %p52 = por %p50, %p51
    %p54 = scmp.ne.s32.totalorder %s37, %s53
    %p55 = scmp.eq.s32.totalorder %s15, 0
    %p56 = por %p54, %p55
    %s57 = ssub.s32 %s17, %s24
    %p58 = scmp.eq.s32.totalorder %s57, 0
    %s60 = sadd.s32 %s59, 1
    %s61 = scalar_select %p58, %s59, %s60
    %p64 = pneg %p58
    %p65 = scmp.eq.s32.totalorder %s9, 1
    %p66 = por %p64, %p65
    %p67 = scmp.ne.s32.totalorder %s59, %s62
    %p68 = scmp.eq.s32.totalorder %s9, 0
    %p69 = por %p67, %p68
    %p70 = scmp.ne.s32.totalorder %s59, %s62
    %p71 = scmp.eq.s32.totalorder %s14, 1
    %p72 = por %p70, %p71
    %p73 = scmp.ne.s32.totalorder %s62, %s63
    %p74 = scmp.eq.s32.totalorder %s14, 0
    %p75 = por %p73, %p74
    %p76 = scmp.ne.s32.totalorder %s62, %s63
    %p77 = scmp.eq.s32.totalorder %s15, 1
    %p78 = por %p76, %p77
    %p80 = scmp.ne.s32.totalorder %s63, %s79
    %p81 = scmp.eq.s32.totalorder %s15, 0
    %p82 = por %p80, %p81
    %s83 = ssub.s32 %s17, %s24
    %p84 = scmp.eq.s32.totalorder %s83, 0
    %s86 = sadd.s32 %s85, 1
    %s87 = scalar_select %p84, %s85, %s86
    %p90 = pneg %p84
    %p91 = scmp.eq.s32.totalorder %s9, 1
    %p92 = por %p90, %p91
    %p93 = scmp.ne.s32.totalorder %s85, %s88
    %p94 = scmp.eq.s32.totalorder %s9, 0
    %p95 = por %p93, %p94
    %p96 = scmp.ne.s32.totalorder %s85, %s88
    %p97 = scmp.eq.s32.totalorder %s14, 1
    %p98 = por %p96, %p97
    %p99 = scmp.ne.s32.totalorder %s88, %s89
    %p100 = scmp.eq.s32.totalorder %s14, 0
    %p101 = por %p99, %p100
    %p102 = scmp.ne.s32.totalorder %s88, %s89
    %p103 = scmp.eq.s32.totalorder %s15, 1
    %p104 = por %p102, %p103
    %p106 = scmp.ne.s32.totalorder %s89, %s105
    %p107 = scmp.eq.s32.totalorder %s15, 0
    %p108 = por %p106, %p107
    %s109 = ssub.s32 %s16, %s28
    %s110 = ssub.s32 %s17, %s24
    %s111 = sor.u32 %s109, %s110
    %p112 = scmp.eq.s32.totalorder %s111, 0
    %s114 = sadd.s32 %s113, 1
    %s115 = scalar_select %p112, %s113, %s114
    %p118 = pneg %p112
    %p119 = scmp.eq.s32.totalorder %s9, 1
    %p120 = por %p118, %p119
    %p121 = scmp.ne.s32.totalorder %s113, %s116
    %p122 = scmp.eq.s32.totalorder %s9, 0
    %p123 = por %p121, %p122
    %p124 = scmp.ne.s32.totalorder %s113, %s116
    %p125 = scmp.eq.s32.totalorder %s14, 1
    %p126 = por %p124, %p125
    %p127 = scmp.ne.s32.totalorder %s116, %s117
    %p128 = scmp.eq.s32.totalorder %s14, 0
    %p129 = por %p127, %p128
    %p130 = scmp.ne.s32.totalorder %s116, %s117
    %p131 = scmp.eq.s32.totalorder %s15, 1
    %p132 = por %p130, %p131
    %p134 = scmp.ne.s32.totalorder %s117, %s133
    %p135 = scmp.eq.s32.totalorder %s15, 0
    %p136 = por %p134, %p135
    %p137 = scmp.le.s32.totalorder 1, %s9
    %p138 = scmp.lt.s32.totalorder %s9, 3
    %p139 = pnand %p137, %p138
    %p140 = pneg %p139
    // Predicated region
    $region9: #{unit_tcn_forward.3} parent=5 // pred_check
      _
    $region10: #{unit_tcn_forward.3} parent=5 // pred_check_branch
      %142 = sbr.rel (%p139) target = $region12
    $region11: #{unit_tcn_forward.3} parent=5 // pred_region
      %s143 = ssub.s32 %s9, 1
      // Predicated region
      $region13: #{unit_tcn_forward.3} parent=11 // pred_check
        %p144 = pneg %p75
      $region14: #{unit_tcn_forward.3} parent=11 // pred_check_branch
        %146 = sbr.rel (%p144) target = $region16
      $region15: #{unit_tcn_forward.3} parent=11 // pred_region
        %p147 = scmp.lt.s32.totalorder %s19, 0
        %s148 = scalar_select %p147, %s19, 0
        %s149 = smul.addr %s148, 8
        %s150 = scalar_lea.vmem %s1, %s149
      $region16: #{unit_tcn_forward.3} parent=11 // pred_fallthru
        _
      // Predicated region
      $region17: #{unit_tcn_forward.3} parent=11 // pred_check
        %p151 = pneg %p101
      $region18: #{unit_tcn_forward.3} parent=11 // pred_check_branch
        %153 = sbr.rel (%p151) target = $region20
      $region19: #{unit_tcn_forward.3} parent=11 // pred_region
        %p154 = scmp.lt.s32.totalorder %s19, 0
        %s155 = scalar_select %p154, %s19, 0
        %s156 = smul.addr %s155, 8
        %s157 = scalar_lea.vmem %s2, %s156
      $region20: #{unit_tcn_forward.3} parent=11 // pred_fallthru
        _
    $region12: #{unit_tcn_forward.3} parent=5 // pred_fallthru
      _
    %p158 = scmp.lt.s32.totalorder %s9, 2
    // Predicated region
    $region21: #{unit_tcn_forward.3} parent=5 // pred_check
      %p159 = pneg %p158
    $region22: #{unit_tcn_forward.3} parent=5 // pred_check_branch
      %161 = sbr.rel (%p159) target = $region24
    $region23: #{unit_tcn_forward.3} parent=5 // pred_region
      // Predicated region
      $region25: #{unit_tcn_forward.3} parent=23 // pred_check
        %p162 = pneg %p43
      $region26: #{unit_tcn_forward.3} parent=23 // pred_check_branch
        %164 = sbr.rel (%p162) target = $region28
      $region27: #{unit_tcn_forward.3} parent=23 // pred_region
        %p165 = scmp.lt.s32.totalorder %s16, 1
        %s166 = scalar_select %p165, %s16, 1
        %p167 = scmp.lt.s32.totalorder %s17, 0
        %s168 = scalar_select %p167, %s17, 0
        %s169 = smul.addr %s168, 2
        %s170 = smul.addr %s166, 2
        %s171 = sadd.s32 %s169, %s170
        %s172 = smul.addr %s171, 4
        %s173 = scalar_lea.vmem %s0, %s172
      $region28: #{unit_tcn_forward.3} parent=23 // pred_fallthru
        _
    $region24: #{unit_tcn_forward.3} parent=5 // pred_fallthru
      _
    %p174 = scmp.le.s32.totalorder 1, %s9
    %p175 = scmp.lt.s32.totalorder %s9, 3
    %p176 = pnand %p174, %p175
    %p177 = pneg %p176
    // Predicated region
    $region29: #{unit_tcn_forward.3} parent=5 // pred_check
      _
    $region30: #{unit_tcn_forward.3} parent=5 // pred_check_branch
      %179 = sbr.rel (%p176) target = $region32
    $region31: #{unit_tcn_forward.3} parent=5 // pred_region
      %s180 = ssub.s32 %s9, 1
      %p181 = scmp.lt.s32.totalorder %s18, 1
      %s182 = scalar_select %p181, %s18, 1
      %p183 = scmp.lt.s32.totalorder %s19, 0
      %s184 = scalar_select %p183, %s19, 0
      %s185 = smul.addr %s184, 2
      %s186 = smul.addr %s182, 2
      %s187 = sadd.s32 %s185, %s186
      %s188 = smul.addr %s187, 4
      %s189 = scalar_lea.vmem %s0, %s188
      %p190 = pneg %p49
      %p191 = pneg %p46
      %p192 = scmp.lt.s32.totalorder %s19, 0
      %s193 = scalar_select %p192, %s19, 0
      %s194 = smul.addr %s193, 8
      %s195 = scalar_lea.vmem %s1, %s194
      %p196 = pneg %p75
      %p197 = pneg %p72
      %p198 = scmp.lt.s32.totalorder %s19, 0
      %s199 = scalar_select %p198, %s19, 0
      %s200 = smul.addr %s199, 8
      %s201 = scalar_lea.vmem %s2, %s200
      %p202 = pneg %p101
      %p203 = pneg %p98
      %p204 = pneg %p129
      %p205 = pneg %p126
      %p206 = scmp.lt.s32.totalorder %s18, 1
      %s207 = scalar_select %p206, %s18, 1
      %p208 = scmp.lt.s32.totalorder %s19, 0
      %s209 = scalar_select %p208, %s19, 0
      %s210 = smul.addr %s209, 2
      %s211 = smul.addr %s207, 2
      %s212 = sadd.s32 %s210, %s211
      %s213 = smul.addr %s212, 8
      %s214 = scalar_lea.vmem %s3, %s213
      %p215 = scmp.lt.s32.totalorder %s18, 1
      %s216 = scalar_select %p215, %s18, 1
      %p217 = scmp.lt.s32.totalorder %s19, 0
      %s218 = scalar_select %p217, %s19, 0
      %s219 = smul.addr %s218, 2
      %s220 = smul.addr %s216, 2
      %s221 = sadd.s32 %s219, %s220
      %s222 = smul.addr %s221, 4
      %s223 = scalar_lea.vmem %s0, %s222
      %p224 = scmp.lt.s32.totalorder %s19, 0
      %s225 = scalar_select %p224, %s19, 0
      %s226 = smul.addr %s225, 8
      %s227 = scalar_lea.vmem %s1, %s226
      %p228 = scmp.lt.s32.totalorder %s19, 0
      %s229 = scalar_select %p228, %s19, 0
      %s230 = smul.addr %s229, 8
      %s231 = scalar_lea.vmem %s2, %s230
      %p232 = scmp.lt.s32.totalorder %s18, 1
      %s233 = scalar_select %p232, %s18, 1
      %p234 = scmp.lt.s32.totalorder %s19, 0
      %s235 = scalar_select %p234, %s19, 0
      %s236 = smul.addr %s235, 2
      %s237 = smul.addr %s233, 2
      %s238 = sadd.s32 %s236, %s237
      %s239 = smul.addr %s238, 8
      %s240 = scalar_lea.vmem %s3, %s239
      %v241 = vld [vmem:[%s223] sm:$0xff]
      %v242 = vunpack.c.l.bf16 %v241
      %v243 = vunpack.c.h.bf16 %v241
      %v244 = vld [vmem:[%s227] sm:$0xff]
      %246 = vset.pattern.permute.xlu0 0
      %247 = vperm.xlu0 %246, %v244
      %v248 = vpop.permute.xlu0 %247
      %v250 = vmul.f32 %v242, %v248
      %v251 = vmul.f32 %v243, %v248
      %v252 = vld [vmem:[%s231] sm:$0xff]
      %254 = vset.pattern.permute.xlu0 0
      %255 = vperm.xlu0 %254, %v252
      %v256 = vpop.permute.xlu0 %255
      %v258 = vadd.f32 %v250, %v256
      %v259 = vadd.f32 %v251, %v256
      %260 = vst [vmem:[%s240] sm:$0xff] %v258
      %261 = vst [vmem:[%s240 + $0x8] sm:$0xff] %v259
      %p262 = scmp.lt.s32.totalorder %s18, 1
      %s263 = scalar_select %p262, %s18, 1
      %p264 = scmp.lt.s32.totalorder %s19, 0
      %s265 = scalar_select %p264, %s19, 0
      %s266 = smul.addr %s265, 2
      %s267 = smul.addr %s263, 2
      %s268 = sadd.s32 %s266, %s267
      %s269 = smul.addr %s268, 8
      %s270 = scalar_lea.vmem %s3, %s269
      // Predicated region
      $region33: #{unit_tcn_forward.3} parent=31 // pred_check
        %p271 = pneg %p126
      $region34: #{unit_tcn_forward.3} parent=31 // pred_check_branch
        %273 = sbr.rel (%p271) target = $region36
      $region35: #{unit_tcn_forward.3} parent=31 // pred_region
        _
      $region36: #{unit_tcn_forward.3} parent=31 // pred_fallthru
        _
    $region32: #{unit_tcn_forward.3} parent=5 // pred_fallthru
      _
    %p274 = scmp.le.s32.totalorder 2, %s9
    // Predicated region
    $region37: #{unit_tcn_forward.3} parent=5 // pred_check
      %p275 = pneg %p274
    $region38: #{unit_tcn_forward.3} parent=5 // pred_check_branch
      %277 = sbr.rel (%p275) target = $region40
    $region39: #{unit_tcn_forward.3} parent=5 // pred_region
      %s278 = ssub.s32 %s9, 2
      // Predicated region
      $region41: #{unit_tcn_forward.3} parent=39 // pred_check
        %p279 = pneg %p132
      $region42: #{unit_tcn_forward.3} parent=39 // pred_check_branch
        %281 = sbr.rel (%p279) target = $region44
      $region43: #{unit_tcn_forward.3} parent=39 // pred_region
        %p282 = scmp.lt.s32.totalorder %s20, 1
        %s283 = scalar_select %p282, %s20, 1
        %p284 = scmp.lt.s32.totalorder %s21, 0
        %s285 = scalar_select %p284, %s21, 0
        %s286 = smul.addr %s285, 2
        %s287 = smul.addr %s283, 2
        %s288 = sadd.s32 %s286, %s287
        %s289 = smul.addr %s288, 8
        %s290 = scalar_lea.vmem %s3, %s289
      $region44: #{unit_tcn_forward.3} parent=39 // pred_fallthru
        _
    $region40: #{unit_tcn_forward.3} parent=5 // pred_fallthru
      _
  $region6: #{unit_tcn_forward.3} parent=0 // loop_footer
    %s13 = sadd.s32 1, %s9
  $region7: #{unit_tcn_forward.3} parent=0 // loop_footer_branch
    %8 = sbr.rel target = $region3
  $region8: #{unit_tcn_forward.3} parent=0 // loop_exit
    _

// kernel: unit_tcn_forward.2
$region0: #{unit_tcn_forward.2}
  #allocation0 [shape = 'u32[]', space=smem, size = 0x4, offset = 0x4, fixed_abs, tag = 'smem constant byte address 0x4 - core index']
  #allocation1 [shape = 'u32[144,128]{1,0:T(1,128)}', space=vmem, size = 0x12000, scoped, tag = 'internal scratch']
  #allocation2 [shape = 'bf16[36,256]{1,0:T(8,128)(2,1)}', space=vmem, size = 0x5000, scoped, tag = 'scratch operand']
  %s0 = inlined_call_operand.vmem [shape: f32[2,4,256], index: 0, kind: input, shape index: {}]
  %s1 = inlined_call_operand.vmem [shape: bf16[8,36], index: 1, kind: input, shape index: {}]
  %s2 = inlined_call_operand.vmem [shape: bf16[2,8,256], index: 2, kind: output, shape index: {0}]
  %s3 = inlined_call_operand.vmem [shape: f32[2,8,2], index: 3, kind: output, shape index: {1}]
  %4 = xla_tuple %s2, %s3
  %s5 = sld [smem:[#allocation0]]
  $region49: #{unit_tcn_forward.2} parent=0
    _
  %s7 = ssub.s32 1, %s5
  %s8 = scalar_select 0, %s7, %s5
  loop: start=0, step=1, limit=4
  $region2: #{unit_tcn_forward.2} parent=0 // loop_pre_header
    _
  $region3: #{unit_tcn_forward.2} parent=0 // loop_header
    %s10 = sphi 0, %s14
    %p11 = scmp.ge.s32.totalorder %s10, 4
    %s20 = sphi 0, %s22
    %s23 = sphi 0, %s20
    %s24 = sphi 0, %s23
    %s40 = sphi 0, %s24
    %s44 = sphi 0, %s44
    %s46 = sphi 0, %s44
    %s47 = sphi 0, %s46
    %s61 = sphi 0, %s47
    %s67 = sphi 0, %s69
    %s70 = sphi 0, %s67
    %s71 = sphi 0, %s70
    %s87 = sphi 0, %s71
    %s93 = sphi 0, %s95
    %s96 = sphi 0, %s93
    %s97 = sphi 0, %s96
    %s113 = sphi 0, %s97
  $region4: #{unit_tcn_forward.2} parent=0 // loop_header_branch
    %13 = sbr.rel (%p11) target = $region8
  $region5: #{unit_tcn_forward.2} parent=0 // loop_body
    %s15 = ssub.s32 %s10, 1
    %s16 = ssub.s32 %s10, 2
    %s17 = sadd.s32 %s10, 1
    %s18 = ssub.s32 %s10, %s17
    %p19 = scmp.eq.s32.totalorder %s18, 0
    %s21 = sadd.s32 %s20, 1
    %s22 = scalar_select %p19, %s20, %s21
    %p25 = pneg %p19
    %p26 = scmp.eq.s32.totalorder %s10, 1
    %p27 = por %p25, %p26
    %p28 = scmp.ne.s32.totalorder %s20, %s23
    %p29 = scmp.eq.s32.totalorder %s10, 0
    %p30 = por %p28, %p29
    %p31 = scmp.ne.s32.totalorder %s20, %s23
    %p32 = scmp.eq.s32.totalorder %s15, 1
    %p33 = por %p31, %p32
    %p34 = scmp.ne.s32.totalorder %s23, %s24
    %p35 = scmp.eq.s32.totalorder %s15, 0
    %p36 = por %p34, %p35
    %p37 = scmp.ne.s32.totalorder %s23, %s24
    %p38 = scmp.eq.s32.totalorder %s16, 1
    %p39 = por %p37, %p38
    %p41 = scmp.ne.s32.totalorder %s24, %s40
    %p42 = scmp.eq.s32.totalorder %s16, 0
    %p43 = por %p41, %p42
    %s45 = sadd.s32 %s44, 1
    %p48 = scmp.eq.s32.totalorder %s10, 1
    %p49 = scmp.ne.s32.totalorder %s44, %s46
    %p50 = scmp.eq.s32.totalorder %s10, 0
    %p51 = por %p49, %p50
    %p52 = scmp.ne.s32.totalorder %s44, %s46
    %p53 = scmp.eq.s32.totalorder %s15, 1
    %p54 = por %p52, %p53
    %p55 = scmp.ne.s32.totalorder %s46, %s47
    %p56 = scmp.eq.s32.totalorder %s15, 0
    %p57 = por %p55, %p56
    %p58 = scmp.ne.s32.totalorder %s46, %s47
    %p59 = scmp.eq.s32.totalorder %s16, 1
    %p60 = por %p58, %p59
    %p62 = scmp.ne.s32.totalorder %s47, %s61
    %p63 = scmp.eq.s32.totalorder %s16, 0
    %p64 = por %p62, %p63
    %s65 = ssub.s32 %s10, %s17
    %p66 = scmp.eq.s32.totalorder %s65, 0
    %s68 = sadd.s32 %s67, 1
    %s69 = scalar_select %p66, %s67, %s68
    %p72 = pneg %p66
    %p73 = scmp.eq.s32.totalorder %s10, 1
    %p74 = por %p72, %p73
    %p75 = scmp.ne.s32.totalorder %s67, %s70
    %p76 = scmp.eq.s32.totalorder %s10, 0
    %p77 = por %p75, %p76
    %p78 = scmp.ne.s32.totalorder %s67, %s70
    %p79 = scmp.eq.s32.totalorder %s15, 1
    %p80 = por %p78, %p79
    %p81 = scmp.ne.s32.totalorder %s70, %s71
    %p82 = scmp.eq.s32.totalorder %s15, 0
    %p83 = por %p81, %p82
    %p84 = scmp.ne.s32.totalorder %s70, %s71
    %p85 = scmp.eq.s32.totalorder %s16, 1
    %p86 = por %p84, %p85
    %p88 = scmp.ne.s32.totalorder %s71, %s87
    %p89 = scmp.eq.s32.totalorder %s16, 0
    %p90 = por %p88, %p89
    %s91 = ssub.s32 %s10, %s17
    %p92 = scmp.eq.s32.totalorder %s91, 0
    %s94 = sadd.s32 %s93, 1
    %s95 = scalar_select %p92, %s93, %s94
    %p98 = pneg %p92
    %p99 = scmp.eq.s32.totalorder %s10, 1
    %p100 = por %p98, %p99
    %p101 = scmp.ne.s32.totalorder %s93, %s96
    %p102 = scmp.eq.s32.totalorder %s10, 0
    %p103 = por %p101, %p102
    %p104 = scmp.ne.s32.totalorder %s93, %s96
    %p105 = scmp.eq.s32.totalorder %s15, 1
    %p106 = por %p104, %p105
    %p107 = scmp.ne.s32.totalorder %s96, %s97
    %p108 = scmp.eq.s32.totalorder %s15, 0
    %p109 = por %p107, %p108
    %p110 = scmp.ne.s32.totalorder %s96, %s97
    %p111 = scmp.eq.s32.totalorder %s16, 1
    %p112 = por %p110, %p111
    %p114 = scmp.ne.s32.totalorder %s97, %s113
    %p115 = scmp.eq.s32.totalorder %s16, 0
    %p116 = por %p114, %p115
    %p117 = scmp.le.s32.totalorder 1, %s10
    %p118 = scmp.lt.s32.totalorder %s10, 3
    %p119 = pnand %p117, %p118
    %p120 = pneg %p119
    // Predicated region
    $region9: #{unit_tcn_forward.2} parent=5 // pred_check
      _
    $region10: #{unit_tcn_forward.2} parent=5 // pred_check_branch
      %122 = sbr.rel (%p119) target = $region12
    $region11: #{unit_tcn_forward.2} parent=5 // pred_region
      %s123 = ssub.s32 %s10, 1
      // Predicated region
      $region13: #{unit_tcn_forward.2} parent=11 // pred_check
        %p124 = pneg %p57
      $region14: #{unit_tcn_forward.2} parent=11 // pred_check_branch
        %126 = sbr.rel (%p124) target = $region16
      $region15: #{unit_tcn_forward.2} parent=11 // pred_region
        _
      $region16: #{unit_tcn_forward.2} parent=11 // pred_fallthru
        _
    $region12: #{unit_tcn_forward.2} parent=5 // pred_fallthru
      _
    %p127 = scmp.lt.s32.totalorder %s10, 2
    // Predicated region
    $region17: #{unit_tcn_forward.2} parent=5 // pred_check
      %p128 = pneg %p127
    $region18: #{unit_tcn_forward.2} parent=5 // pred_check_branch
      %130 = sbr.rel (%p128) target = $region20
    $region19: #{unit_tcn_forward.2} parent=5 // pred_region
      // Predicated region
      $region21: #{unit_tcn_forward.2} parent=19 // pred_check
        %p131 = pneg %p30
      $region22: #{unit_tcn_forward.2} parent=19 // pred_check_branch
        %133 = sbr.rel (%p131) target = $region24
      $region23: #{unit_tcn_forward.2} parent=19 // pred_region
        %p134 = scmp.lt.s32.totalorder %s10, 1
        %s135 = scalar_select %p134, %s10, 1
        %s136 = smul.addr %s135, 2
        %s137 = smul.addr %s136, 4
        %s138 = scalar_lea.vmem %s0, %s137
      $region24: #{unit_tcn_forward.2} parent=19 // pred_fallthru
        _
    $region20: #{unit_tcn_forward.2} parent=5 // pred_fallthru
      _
    %p139 = scmp.le.s32.totalorder 1, %s10
    %p140 = scmp.lt.s32.totalorder %s10, 3
    %p141 = pnand %p139, %p140
    %p142 = pneg %p141
    // Predicated region
    $region25: #{unit_tcn_forward.2} parent=5 // pred_check
      _
    $region26: #{unit_tcn_forward.2} parent=5 // pred_check_branch
      %144 = sbr.rel (%p141) target = $region28
    $region27: #{unit_tcn_forward.2} parent=5 // pred_region
      %s145 = ssub.s32 %s10, 1
      %p146 = scmp.lt.s32.totalorder %s15, 1
      %s147 = scalar_select %p146, %s15, 1
      %s148 = smul.addr %s147, 2
      %s149 = smul.addr %s148, 4
      %s150 = scalar_lea.vmem %s0, %s149
      %p151 = pneg %p36
      %p152 = pneg %p33
      %p153 = pneg %p57
      %p154 = pneg %p54
      %p155 = pneg %p83
      %p156 = pneg %p80
      %p157 = scmp.lt.s32.totalorder %s15, 1
      %s158 = scalar_select %p157, %s15, 1
      %s159 = smul.addr %s158, 2
      %s160 = smul.addr %s159, 4
      %s161 = scalar_lea.vmem %s2, %s160
      %p162 = pneg %p109
      %p163 = pneg %p106
      %p164 = scmp.lt.s32.totalorder %s15, 1
      %s165 = scalar_select %p164, %s15, 1
      %s166 = smul.addr %s165, 8
      %s167 = scalar_lea.vmem %s3, %s166
      %p168 = scmp.lt.s32.totalorder %s15, 1
      %s169 = scalar_select %p168, %s15, 1
      %s170 = smul.addr %s169, 2
      %s171 = smul.addr %s170, 4
      %s172 = scalar_lea.vmem %s0, %s171
      %p173 = scmp.lt.s32.totalorder %s15, 1
      %s174 = scalar_select %p173, %s15, 1
      %s175 = smul.addr %s174, 2
      %s176 = smul.addr %s175, 4
      %s177 = scalar_lea.vmem %s2, %s176
      %p178 = scmp.lt.s32.totalorder %s15, 1
      %s179 = scalar_select %p178, %s15, 1
      %s180 = smul.addr %s179, 8
      %s181 = scalar_lea.vmem %s3, %s180
      %vm183 = vcmask 517120
      %184 = vst.msk [vmem:[#allocation2] sm:$0x3] %vm183, 0
      %v185 = vld [vmem:[%s172] sm:$0xff]
      %v187 = vcombine.high %v185, %v185
      %v189 = vpack.c.bf16 %v185, %v185
      %v190 = vpack.c.bf16 %v187, %v187
      %v193 = vunpack.c.l.b16 %v189
      %v194 = vunpack.c.l.b16 %v190
      %v195 = vpack.c.b16 %v194, %v193
      %196 = vrot.lane.b32.xlu0 %v195, 64
      %v197 = vpop.permute.xlu0 %196
      %v198 = vrot.slane %v197, 4
      %vm199 = vcmask 523264
      %v200 = vsel %vm199, %v198, %v197
      %vm202 = vcmask 1041920
      %vm203 = vcmask 1045508
      %vm204 = vmor %vm203, %vm202
      %205 = vst.msk [vmem:[#allocation2] sm:$0x33] %vm204, %v200
      %vm206 = vcmask 388098
      %207 = vst.msk [vmem:[#allocation2] sm:$0xc] %vm206, 0
      %v208 = vld [vmem:[%s172] sm:$0xff]
      %v210 = vcombine.high %v208, %v208
      %v212 = vpack.c.bf16 %v208, %v208
      %v213 = vpack.c.bf16 %v210, %v210
      %v216 = vunpack.c.l.b16 %v212
      %v217 = vunpack.c.l.b16 %v213
      %v218 = vpack.c.b16 %v217, %v216
      %v219 = vrot.slane %v218, 6
      %220 = vrot.lane.b32.xlu0 %v219, 48
      %v221 = vpop.permute.xlu0 %220
      %v222 = vrot.slane %v221, 4
      %vm223 = vcmask 392192
      %v224 = vsel %vm223, %v222, %v221
      %vm226 = vcmask 1043842
      %vm227 = vcmask 1047558
      %vm228 = vmor %vm227, %vm226
      %229 = vst.msk [vmem:[#allocation2] sm:$0xcc] %vm228, %v224
      %vm230 = vcmask 254976
      %231 = vst.msk [vmem:[#allocation2 + $0x8] sm:$0x3] %vm230, 0
      %v232 = vld [vmem:[%s172] sm:$0xff]
      %v234 = vcombine.high %v232, %v232
      %v236 = vpack.c.bf16 %v232, %v232
      %v237 = vpack.c.bf16 %v234, %v234
      %v240 = vunpack.c.l.b16 %v236
      %v241 = vunpack.c.l.b16 %v237
      %v242 = vpack.c.b16 %v241, %v240
      %243 = vrot.lane.b32.xlu0 %v242, 32
      %v244 = vpop.permute.xlu0 %243
      %v245 = vrot.slane %v244, 4
      %vm246 = vcmask 261120
      %v247 = vsel %vm246, %v245, %v244
      %vm249 = vcmask 1041664
      %vm250 = vmor %vm203, %vm249
      %251 = vst.msk [vmem:[#allocation2 + $0x8] sm:$0x33] %vm250, %v247
      %vm252 = vcmask 125954
      %253 = vst.msk [vmem:[#allocation2 + $0x8] sm:$0xc] %vm252, 0
      %v254 = vld [vmem:[%s172] sm:$0xff]
      %v256 = vcombine.high %v254, %v254
      %v258 = vpack.c.bf16 %v254, %v254
      %v259 = vpack.c.bf16 %v256, %v256
      %v262 = vunpack.c.l.b16 %v258
      %v263 = vunpack.c.l.b16 %v259
      %v264 = vpack.c.b16 %v263, %v262
      %v265 = vrot.slane %v264, 6
      %266 = vrot.lane.b32.xlu0 %v265, 16
      %v267 = vpop.permute.xlu0 %266
      %v268 = vrot.slane %v267, 4
      %vm269 = vcmask 130048
      %v270 = vsel %vm269, %v268, %v267
      %vm272 = vcmask 1043586
      %vm273 = vmor %vm227, %vm272
      %274 = vst.msk [vmem:[#allocation2 + $0x8] sm:$0xcc] %vm273, %v270
      %v275 = vld [vmem:[%s172] sm:$0xff]
      %v277 = vcombine.high %v275, %v275
      %v279 = vpack.c.bf16 %v275, %v275
      %v280 = vpack.c.bf16 %v277, %v277
      %v283 = vunpack.c.l.b16 %v279
      %v284 = vunpack.c.l.b16 %v280
      %v285 = vpack.c.b16 %v284, %v283
      %287 = vst [vmem:[#allocation2 + $0x10] sm:$0x33] %v285
      %vm288 = vcmask 1044354
      %289 = vst.msk [vmem:[#allocation2 + $0x14] sm:$0xc] %vm288, 0
      %v290 = vld [vmem:[%s172] sm:$0xff]
      %v292 = vcombine.high %v290, %v290
      %v294 = vpack.c.bf16 %v290, %v290
      %v295 = vpack.c.bf16 %v292, %v292
      %v298 = vunpack.c.l.b16 %v294
      %v299 = vunpack.c.l.b16 %v295
      %v300 = vpack.c.b16 %v299, %v298
      %v301 = vrot.slane %v300, 6
      %302 = vrot.lane.b32.xlu0 %v301, 112
      %v303 = vpop.permute.xlu0 %302
      %v304 = vrot.slane %v303, 4
      %vm305 = vcmask 916480
      %v306 = vsel %vm305, %v303, %v304
      %vm308 = vcmask 1043458
      %vm309 = vcmask 916486
      %vm310 = vmor %vm309, %vm308
      %311 = vst.msk [vmem:[#allocation2 + $0x10] sm:$0xcc] %vm310, %v306
      %vm312 = vcmask 1042176
      %313 = vst.msk [vmem:[#allocation2 + $0x1c] sm:$0x3] %vm312, 0
      %v314 = vld [vmem:[%s172] sm:$0xff]
      %v316 = vcombine.high %v314, %v314
      %v318 = vpack.c.bf16 %v314, %v314
      %v319 = vpack.c.bf16 %v316, %v316
      %v322 = vunpack.c.l.b16 %v318
      %v323 = vunpack.c.l.b16 %v319
      %v324 = vpack.c.b16 %v323, %v322
      %325 = vrot.lane.b32.xlu0 %v324, 96
      %v326 = vpop.permute.xlu0 %325
      %v327 = vrot.slane %v326, 4
      %vm328 = vcmask 785408
      %v329 = vsel %vm328, %v326, %v327
      %vm331 = vcmask 1041408
      %vm332 = vcmask 783364
      %vm333 = vmor %vm332, %vm331
      %334 = vst.msk [vmem:[#allocation2 + $0x18] sm:$0x33] %vm333, %v329
      %vm335 = vcmask 1044098
      %336 = vst.msk [vmem:[#allocation2 + $0x1c] sm:$0xc] %vm335, 0
      %v337 = vld [vmem:[%s172] sm:$0xff]
      %v339 = vcombine.high %v337, %v337
      %v341 = vpack.c.bf16 %v337, %v337
      %v342 = vpack.c.bf16 %v339, %v339
      %v345 = vunpack.c.l.b16 %v341
      %v346 = vunpack.c.l.b16 %v342
      %v347 = vpack.c.b16 %v346, %v345
      %v348 = vrot.slane %v347, 6
      %349 = vrot.lane.b32.xlu0 %v348, 80
      %v350 = vpop.permute.xlu0 %349
      %v351 = vrot.slane %v350, 4
      %vm352 = vcmask 654336
      %v353 = vsel %vm352, %v350, %v351
      %vm355 = vcmask 654342
      %vm356 = vmor %vm355, %vm308
      %357 = vst.msk [vmem:[#allocation2 + $0x18] sm:$0xcc] %vm356, %v353
      %358 = vst.msk [vmem:[#allocation2 + $0x24] sm:$0x3] %vm202, 0
      %v359 = vld [vmem:[%s172] sm:$0xff]
      %v361 = vcombine.high %v359, %v359
      %v363 = vpack.c.bf16 %v359, %v359
      %v364 = vpack.c.bf16 %v361, %v361
      %v367 = vunpack.c.l.b16 %v363
      %v368 = vunpack.c.l.b16 %v364
      %v369 = vpack.c.b16 %v368, %v367
      %370 = vrot.lane.b32.xlu0 %v369, 64
      %v371 = vpop.permute.xlu0 %370
      %v372 = vrot.slane %v371, 4
      %v373 = vsel %vm199, %v371, %v372
      %vm375 = vcmask 521220
      %vm376 = vmor %vm375, %vm331
      %377 = vst.msk [vmem:[#allocation2 + $0x20] sm:$0x33] %vm376, %v373
      %v378 = vld [vmem:[%s1] sm:$0xf]
      %v379 = vld [vmem:[#allocation2] sm:$0xff]
      %v380 = vld [vmem:[#allocation2 + $0x8] sm:$0xff]
      %v381 = vld [vmem:[#allocation2 + $0x10] sm:$0xff]
      %v382 = vld [vmem:[#allocation2 + $0x18] sm:$0xff]
      %v383 = vld [vmem:[#allocation2 + $0x20] sm:$0x33]
      %v389 = vunpack.c.l.b16 %v379
      %v390 = vunpack.c.h.b16 %v379
      %v391 = vunpack.c.l.b16 %v380
      %v392 = vunpack.c.h.b16 %v380
      %v393 = vunpack.c.l.b16 %v381
      %v394 = vunpack.c.h.b16 %v381
      %v395 = vunpack.c.l.b16 %v382
      %v396 = vunpack.c.h.b16 %v382
      %v397 = vunpack.c.l.b16 %v383
      %v398 = vunpack.c.h.b16 %v383
      %v399 = vpack.c.b16 %v391, %v389
      %v400 = vpack.c.b16 %v392, %v390
      %v401 = vpack.c.b16 %v395, %v393
      %v402 = vpack.c.b16 %v396, %v394
      %v403 = vpack.c.b16 %v397, %v397
      %v404 = vpack.c.b16 %v398, %v398
      %vm409 = vcmask 293888
      %v411 = vsel %vm409, %v378, 0
      %v414 = vsel %vm331, %v403, 0
      %v417 = vsel %vm331, %v404, 0
      %419 = vmatprep.subr.bf16.mxu0 0
      %420 = vmatpush1.bf16.msra.mxu0 0
      %421 = vmatprep.subr.bf16.mxu0 0
      %422 = vmatpush1.bf16.msra.mxu0 0
      %423 = vmatprep.subr.bf16.mxu0 0
      %424 = vmatpush1.bf16.msra.mxu0 0
      %425 = vmatprep.subr.bf16.mxu0 0
      %426 = vmatpush1.bf16.msra.mxu0 0
      %427 = vmatprep.subr.bf16.mxu0 0
      %428 = vmatpush1.bf16.msra.mxu0 0
      %429 = vmatprep.subr.bf16.mxu0 %v417
      %430 = vmatpush1.bf16.msra.mxu0 %v414
      %431 = vmatprep.subr.bf16.mxu0 %v402
      %432 = vmatpush1.bf16.msra.mxu0 %v401
      %433 = vmatprep.subr.bf16.mxu0 %v400
      %434 = vmatpush1.bf16.msra.mxu0 %v399
      %435 = vmatprep.subr.bf16.mxu0 0
      %436 = vmatpush2.bf16.msra.mxu0 0
      %437 = vmatprep.subr.bf16.mxu0 0
      %438 = vmatpush2.bf16.msra.mxu0 0
      %439 = vmatprep.subr.bf16.mxu0 0
      %440 = vmatpush2.bf16.msra.mxu0 0
      %441 = vmatprep.subr.bf16.mxu0 0
      %442 = vmatpush2.bf16.msra.mxu0 0
      %443 = vmatprep.subr.bf16.mxu0 0
      %444 = vmatpush2.bf16.msra.mxu0 0
      %445 = vmatprep.subr.bf16.mxu0 0
      %446 = vmatpush2.bf16.msra.mxu0 0
      %447 = vmatprep.subr.bf16.mxu0 0
      %448 = vmatpush2.bf16.msra.mxu0 0
      %449 = vmatprep.subr.bf16.mxu0 0
      %450 = vmatpush2.bf16.msra.mxu0 0
      %451 = vmatprep.mubr.bf16.mxu0 0
      %452 = vmatmul.mubr.bf16.gmra.mxu0 %v411
      %v453 = vpop.f32.mrf.mxu0
      %v454 = vadd.f32 0.0, %v453
      %v455 = vpop.f32.mrf.mxu0
      %v456 = vadd.f32 0.0, %v455
      %v457 = vpop.f32.mrf.mxu0
      %v458 = vpop.f32.mrf.mxu0
      %459 = vdwg.mxu0
      %v460 = vpack.c.bf16 %v454, %v454
      %v461 = vpack.c.bf16 %v456, %v456
      %v464 = vunpack.c.l.b16 %v460
      %v465 = vunpack.c.l.b16 %v461
      %v466 = vpack.c.b16 %v465, %v464
      %468 = vst [vmem:[%s177] sm:$0xff] %v466
      %v469 = vadd.f32 %v454, %v456
      %470 = vadd.xlane.f32.xlu0 %v469
      %v471 = vpop.xlane.xlu0 %470
      %vm472 = vcmask 7168
      %473 = vst.msk [vmem:[%s181] sm:$0xff] %vm472, %v471
      %v474 = vmul.f32 %v454, %v454
      %v475 = vmul.f32 %v456, %v456
      %v476 = vadd.f32 %v474, %v475
      %477 = vadd.xlane.f32.xlu0 %v476
      %v478 = vpop.xlane.xlu0 %477
      %vm479 = vcmask 15368
      %480 = vst.msk [vmem:[%s181] sm:$0xff] %vm479, %v478
      %p481 = scmp.lt.s32.totalorder %s15, 1
      %s482 = scalar_select %p481, %s15, 1
      %s483 = smul.addr %s482, 2
      %s484 = smul.addr %s483, 4
      %s485 = scalar_lea.vmem %s2, %s484
      %p486 = scmp.lt.s32.totalorder %s15, 1
      %s487 = scalar_select %p486, %s15, 1
      %s488 = smul.addr %s487, 8
      %s489 = scalar_lea.vmem %s3, %s488
      // Predicated region
      $region29: #{unit_tcn_forward.2} parent=27 // pred_check
        %p490 = pneg %p80
      $region30: #{unit_tcn_forward.2} parent=27 // pred_check_branch
        %492 = sbr.rel (%p490) target = $region32
      $region31: #{unit_tcn_forward.2} parent=27 // pred_region
        _
      $region32: #{unit_tcn_forward.2} parent=27 // pred_fallthru
        _
      // Predicated region
      $region33: #{unit_tcn_forward.2} parent=27 // pred_check
        %p493 = pneg %p106
      $region34: #{unit_tcn_forward.2} parent=27 // pred_check_branch
        %495 = sbr.rel (%p493) target = $region36
      $region35: #{unit_tcn_forward.2} parent=27 // pred_region
        _
      $region36: #{unit_tcn_forward.2} parent=27 // pred_fallthru
        _
    $region28: #{unit_tcn_forward.2} parent=5 // pred_fallthru
      _
    %p496 = scmp.le.s32.totalorder 2, %s10
    // Predicated region
    $region37: #{unit_tcn_forward.2} parent=5 // pred_check
      %p497 = pneg %p496
    $region38: #{unit_tcn_forward.2} parent=5 // pred_check_branch
      %499 = sbr.rel (%p497) target = $region40
    $region39: #{unit_tcn_forward.2} parent=5 // pred_region
      %s500 = ssub.s32 %s10, 2
      // Predicated region
      $region41: #{unit_tcn_forward.2} parent=39 // pred_check
        %p501 = pneg %p86
      $region42: #{unit_tcn_forward.2} parent=39 // pred_check_branch
        %503 = sbr.rel (%p501) target = $region44
      $region43: #{unit_tcn_forward.2} parent=39 // pred_region
        %p504 = scmp.lt.s32.totalorder %s16, 1
        %s505 = scalar_select %p504, %s16, 1
        %s506 = smul.addr %s505, 2
        %s507 = smul.addr %s506, 4
        %s508 = scalar_lea.vmem %s2, %s507
      $region44: #{unit_tcn_forward.2} parent=39 // pred_fallthru
        _
      // Predicated region
      $region45: #{unit_tcn_forward.2} parent=39 // pred_check
        %p509 = pneg %p112
      $region46: #{unit_tcn_forward.2} parent=39 // pred_check_branch
        %511 = sbr.rel (%p509) target = $region48
      $region47: #{unit_tcn_forward.2} parent=39 // pred_region
        %p512 = scmp.lt.s32.totalorder %s16, 1
        %s513 = scalar_select %p512, %s16, 1
        %s514 = smul.addr %s513, 8
        %s515 = scalar_lea.vmem %s3, %s514
      $region48: #{unit_tcn_forward.2} parent=39 // pred_fallthru
        _
    $region40: #{unit_tcn_forward.2} parent=5 // pred_fallthru
      _
  $region6: #{unit_tcn_forward.2} parent=0 // loop_footer
    %s14 = sadd.s32 1, %s10
  $region7: #{unit_tcn_forward.2} parent=0 // loop_footer_branch
    %9 = sbr.rel target = $region3
  $region8: #{unit_tcn_forward.2} parent=0 // loop_exit
    _

</llo_original>
